<compile_context>
chip_gen: v7x
topology: tpu7x:2x2x1
jax: 0.10.0
libtpu: 0.0.40
codegen_flags: <defaults>
</compile_context>

<pallas_src>
import jax
import jax.numpy as jnp
from jax.experimental import pallas as pl
from jax.experimental.pallas import tpu as pltpu


def generate_filter(start, end, size):
    return [[0.0 if i + j > end or i + j <= start else 1.0 for j in range(size)]
            for i in range(size)]


def _filter_kernel(x_ref, filt_ref, o_ref):
    # x_ref: (TR, COLS) tile; filt_ref: (1, COLS), VMEM-resident.
    # The (1, COLS) operand broadcasts over rows on the VPU.
    o_ref[...] = (x_ref[...] * filt_ref[...]).astype(o_ref.dtype)


def _choose_row_tile(rows, row_bytes, target_tile_bytes):
    """Largest multiple-of-8 row tile whose x tile stays near the byte target."""
    tr = max(8, (target_tile_bytes // max(row_bytes, 1)) // 8 * 8)
    tr = min(tr, rows)
    # Guarantee >= 2 grid steps when possible so v7x's second TensorCore gets
    # work on the "parallel" axis (no effect on single-TC v5e/v6e).
    if rows >= 16:
        half = max(8, (rows // 2) // 8 * 8)
        tr = min(tr, half)
    return tr


class FilterPallas:
    """JAX/Pallas port of the PyTorch Filter module."""

    _TARGET_TILE_BYTES = 4 << 20   # ~4 MiB x tiles: past the ~85% HBM-roofline knee

    def __init__(self, size, band_start, band_end, use_learnable=True,
                 norm=False, key=None):
        self.size = size
        self.use_learnable = use_learnable
        self.norm = norm
        self.base = jnp.asarray(generate_filter(band_start, band_end, size),
                                dtype=jnp.float32)
        if use_learnable:
            if key is None:
                key = jax.random.PRNGKey(0)
            # torch: randn(size,size).normal_(0.0, 0.1)
            self.learnable = 0.1 * jax.random.normal(key, (size, size),
                                                     dtype=jnp.float32)
        else:
            self.learnable = None
        # Kept as a device scalar (no host sync at construction).  Note: can
        # be zero for an empty band -- same divide-by-zero as the reference.
        self.ft_num = jnp.sum(self.base) if norm else None

    def _make_filter(self):
        filt = self.base
        if self.use_learnable:
            filt = filt + (2.0 * jax.nn.sigmoid(self.learnable) - 1.0)
        if self.norm:
            # Folded into the filter: x*(f/ft) vs (x*f)/ft is a benign f32
            # reassociation (~1 ulp).
            filt = filt / self.ft_num
        return filt.astype(jnp.float32)

    def __call__(self, x):
        # x: (N, C, size, size), NCHW; output keeps x.dtype.
        n, c, h, w = x.shape
        assert h == self.size and w == self.size

        rows = n * c
        cols = h * w

        # Hoisted, grid-invariant filter (sigmoid + norm folded in).
        filt2d = self._make_filter().reshape(1, cols)
        if x.dtype == jnp.bfloat16:
            # v6e/v7x VPUs are bf16-native: multiply in x.dtype, drop the f32
            # temp from the VMEM budget.  f32 inputs keep the exact f32 path.
            filt2d = filt2d.astype(jnp.bfloat16)

        # Lane-dense packing for tiny filters: pack g images per row so the
        # output last dim is a multiple of 128 (unmasked vector stores).
        g = 1
        if cols < 128 and 128 % cols == 0:
            g = 128 // cols
        cols_eff = cols * g
        if g > 1:
            filt2d = jnp.tile(filt2d, (1, g))

        # Pad rows so the packed row count is a multiple of 8 (no giant
        # single-block fallback), then slice the padding back off afterwards.
        row_quant = 8 * g
        rows_pad = -(-rows // row_quant) * row_quant
        xf = x.reshape(rows, cols)
        if rows_pad != rows:
            xf = jnp.pad(xf, ((0, rows_pad - rows), (0, 0)))
        packed_rows = rows_pad // g
        xf = xf.reshape(packed_rows, cols_eff)

        itemsize = x.dtype.itemsize
        row_bytes = cols_eff * itemsize
        tr = _choose_row_tile(packed_rows, row_bytes, self._TARGET_TILE_BYTES)
        grid = (pl.cdiv(packed_rows, tr),)

        # Live VMEM: double-buffered x-in + y-out + resident filter, with margin.
        live = 4 * tr * cols_eff * itemsize + filt2d.size * filt2d.dtype.itemsize
        vmem_limit = int(min(60 << 20, max(2 * live, 32 << 20)))

        yf = pl.pallas_call(
            _filter_kernel,
            out_shape=jax.ShapeDtypeStruct((packed_rows, cols_eff), x.dtype),
            grid=grid,
            in_specs=[
                pl.BlockSpec((tr, cols_eff), lambda i: (i, 0)),   # streamed x tile
                pl.BlockSpec((1, cols_eff), lambda i: (0, 0)),    # resident filter
            ],
            out_specs=pl.BlockSpec((tr, cols_eff), lambda i: (i, 0)),
            compiler_params=pltpu.CompilerParams(
                dimension_semantics=("parallel",),
                vmem_limit_bytes=vmem_limit),
        )(xf, filt2d)

        y = yf.reshape(rows_pad, cols)
        if rows_pad != rows:
            y = y[:rows]
        return y.reshape(n, c, h, w)


def _reference(x, base, learnable, norm, ft_num):
    filt = base
    if learnable is not None:
        filt = filt + (2.0 * jax.nn.sigmoid(learnable) - 1.0)
    y = x * filt
    if norm:
        y = y / ft_num
    return y


if __name__ == "__main__":
    key = jax.random.PRNGKey(0)
    k_x, k_w, k_x2 = jax.random.split(key, 3)

    N, C, SIZE = 2, 4, 16
    band_start, band_end = SIZE // 16, SIZE // 8  # small low-band filter
    x = jax.random.normal(k_x, (N, C, SIZE, SIZE), dtype=jnp.float32)

    # use_learnable=True, norm=False path
    mod = FilterPallas(SIZE, band_start, band_end,
                       use_learnable=True, norm=False, key=k_w)
    y = jax.block_until_ready(mod(x))
    y_ref = _reference(x, mod.base, mod.learnable, False, None)
    assert y.shape == x.shape and y.dtype == x.dtype
    assert jnp.allclose(y, y_ref, atol=1e-5, rtol=1e-5), "mismatch (learnable)"

    # norm=True path
    mod_n = FilterPallas(SIZE, band_start, band_end,
                         use_learnable=True, norm=True, key=k_w)
    y_n = jax.block_until_ready(mod_n(x))
    y_n_ref = _reference(x, mod_n.base, mod_n.learnable, True, mod_n.ft_num)
    assert jnp.allclose(y_n, y_n_ref, atol=1e-5, rtol=1e-5), "mismatch (norm)"

    # small-size path: cols = 64 < 128 (lane packing) and rows = 6 (padding)
    S2 = 8
    x2 = jax.random.normal(k_x2, (2, 3, S2, S2), dtype=jnp.float32)
    mod2 = FilterPallas(S2, 1, 4, use_learnable=True, norm=False, key=k_w)
    y2 = jax.block_until_ready(mod2(x2))
    y2_ref = _reference(x2, mod2.base, mod2.learnable, False, None)
    assert y2.shape == x2.shape
    assert jnp.allclose(y2, y2_ref, atol=1e-5, rtol=1e-5), "mismatch (packed)"

    # bf16 path (filter pre-cast, native-dtype multiply)
    xb = x.astype(jnp.bfloat16)
    yb = jax.block_until_ready(mod(xb))
    yb_ref = _reference(xb.astype(jnp.float32), mod.base, mod.learnable, False, None)
    assert yb.dtype == jnp.bfloat16
    assert jnp.allclose(yb.astype(jnp.float32), yb_ref, atol=3e-2, rtol=3e-2), \
        "mismatch (bf16)"

    print("KERNEL_OK")
</pallas_src>

<mosaic_0001>
module attributes {stable_mosaic.version = 11 : i64} {
  func.func @_filter_kernel(%arg0: i32, %arg1: memref<8x256xf32, #tpu.memory_space<vmem>>, %arg2: memref<1x256xf32, #tpu.memory_space<vmem>>, %arg3: memref<8x256xf32, #tpu.memory_space<vmem>>) attributes {dimension_semantics = [#tpu.dimension_semantics<parallel>], iteration_bounds = array<i64: 1>, scalar_prefetch = 0 : i64, scratch_operands = 0 : i64, tpu.core_type = #tpu.core_type<tc>, window_params = [{transform_indices = @transform_0, window_bounds = array<i64: 8, 256>}, {pipeline_mode = #tpu.pipeline_mode<synchronous>, transform_indices = @transform_1, window_bounds = array<i64: 1, 256>}, {transform_indices = @transform_2, window_bounds = array<i64: 8, 256>}]} {
    %c0 = arith.constant 0 : index
    %c0_0 = arith.constant 0 : index
    %0 = vector.load %arg1[%c0, %c0_0] : memref<8x256xf32, #tpu.memory_space<vmem>>, vector<8x256xf32>
    %c0_1 = arith.constant 0 : index
    %c0_2 = arith.constant 0 : index
    %1 = vector.load %arg2[%c0_1, %c0_2] : memref<1x256xf32, #tpu.memory_space<vmem>>, vector<1x256xf32>
    %2 = vector.broadcast %1 : vector<1x256xf32> to vector<8x256xf32>
    %3 = arith.mulf %0, %2 : vector<8x256xf32>
    %c0_3 = arith.constant 0 : index
    %c0_4 = arith.constant 0 : index
    %4 = vector.load %arg3[%c0_3, %c0_4] : memref<8x256xf32, #tpu.memory_space<vmem>>, vector<8x256xf32>
    tpu.vector_store %arg3[%c0_3, %c0_4], %3 {strides = array<i32>} : memref<8x256xf32, #tpu.memory_space<vmem>>, vector<8x256xf32>,
    return
  }
  func.func @transform_0(%arg0: i32) -> (i32, i32) {
    %c0_i32 = arith.constant 0 : i32
    %c0_i32_0 = arith.constant 0 : i32
    return %arg0, %c0_i32 : i32, i32
  }
  func.func @transform_1(%arg0: i32) -> (i32, i32) {
    %c0_i32 = arith.constant 0 : i32
    %c0_i32_0 = arith.constant 0 : i32
    %c0_i32_1 = arith.constant 0 : i32
    return %c0_i32, %c0_i32_0 : i32, i32
  }
  func.func @transform_2(%arg0: i32) -> (i32, i32) {
    %c0_i32 = arith.constant 0 : i32
    %c0_i32_0 = arith.constant 0 : i32
    return %arg0, %c0_i32 : i32, i32
  }
}

</mosaic_0001>

<llo_original>
// kernel: tpu_custom_call.1
$region0: #{tpu_custom_call.1}
  #allocation0 [shape = 'u32[]', space=smem, size = 0x4, offset = 0x4, fixed_abs, tag = 'smem constant byte address 0x4 - core index']
  #allocation1 [shape = 'u32[144,128]{1,0:T(1,128)}', space=vmem, size = 0x12000, scoped, tag = 'internal scratch']
  %s0 = inlined_call_operand.hbm [shape: f32[8,256], index: 0, kind: input, shape index: {}]
  %s1 = inlined_call_operand.vmem [shape: f32[1,256], index: 1, kind: input, shape index: {}]
  %s2 = inlined_call_operand.hbm [shape: f32[8,256], index: 2, kind: output, shape index: {}]
  %s3 = sld [smem:[#allocation0]]
  $region22: #{tpu_custom_call.1} parent=0
    _
  %s5 = ssub.s32 1, %s3
  %s6 = scalar_select 0, %s5, %s3
  $region1: #{tpu_custom_call.1} parent=0
    #allocation2 [shape = 'u8[8192]{0}', space=vmem, size = 0x2000, scoped, tag = 'input window, operand 0, single buffered']
    #allocation3 [shape = 's32[1]{0}', space=sflag, size = 0x4, scoped, tag = 'scoped memory for tpu_custom_call.1']
    #allocation4 [shape = 's32[1]{0}', space=sflag, size = 0x4, scoped, tag = 'scoped memory for tpu_custom_call.1']
    #allocation5 [shape = 'u8[8192]{0}', space=vmem, size = 0x2000, scoped, tag = 'output window, operand 0, single buffered']
    %7 = vsyncpa [#allocation3], 0
    %8 = vsyncpa [#allocation4], 0
    // Predicated region
    $region2: #{tpu_custom_call.1} parent=1 // pred_check
      _
    $region3: #{tpu_custom_call.1} parent=1 // pred_check_branch
      %10 = sbr.rel (0) target = $region5
    $region4: #{tpu_custom_call.1} parent=1 // pred_region
      %s12 = ssub.s32 256, 256
      %13 = vsyncadd [#allocation3], %s12
      %s15 = sshll.u32 [#allocation2], 4
      %s16 = int_to_ptr.vmem [resolvable:$true] %s15
      %18 = dma.hbm_to_vmem [thread:$0]  %s0, 256, %s16, [#allocation3]
    $region5: #{tpu_custom_call.1} parent=1 // pred_fallthru
      _
    // Predicated region
    $region6: #{tpu_custom_call.1} parent=1 // pred_check
      _
    $region7: #{tpu_custom_call.1} parent=1 // pred_check_branch
      %20 = sbr.rel (0) target = $region9
    $region8: #{tpu_custom_call.1} parent=1 // pred_region
      _
    $region9: #{tpu_custom_call.1} parent=1 // pred_fallthru
      _
    // Predicated region
    $region10: #{tpu_custom_call.1} parent=1 // pred_check
      _
    $region11: #{tpu_custom_call.1} parent=1 // pred_check_branch
      %22 = sbr.rel (0) target = $region13
    $region12: #{tpu_custom_call.1} parent=1 // pred_region
      %23 = dma.done [#allocation3], 256
    $region13: #{tpu_custom_call.1} parent=1 // pred_fallthru
      _
    %v24 = vld [vmem:[#allocation2] sm:$0xff]
    %v25 = vld [vmem:[#allocation2 + $0x8] sm:$0xff]
    %v26 = vld [vmem:[%s1] sm:$0x3]
    %v28 = vlaneseq
    %v29 = vshrl.u32 %v28, 7
    %v30 = vsub.s32 0, %v29
    %v31 = vrot.slane %v26, %v30
    %v32 = vlaneseq
    %v33 = vshrl.u32 %v32, 7
    %v34 = vsub.s32 1, %v33
    %v35 = vrot.slane %v26, %v34
    %v38 = vmul.f32 %v24, %v31
    %v39 = vmul.f32 %v25, %v35
    %40 = vst [vmem:[#allocation5] sm:$0xff] %v38
    %41 = vst [vmem:[#allocation5 + $0x8] sm:$0xff] %v39
    // Predicated region
    $region14: #{tpu_custom_call.1} parent=1 // pred_check
      _
    $region15: #{tpu_custom_call.1} parent=1 // pred_check_branch
      %43 = sbr.rel (0) target = $region17
    $region16: #{tpu_custom_call.1} parent=1 // pred_region
      %s45 = ssub.s32 256, 256
      %46 = vsyncadd [#allocation4], %s45
      %s48 = sshll.u32 [#allocation5], 4
      %s49 = int_to_ptr.vmem [resolvable:$true] %s48
      %51 = dma.vmem_to_hbm [thread:$0]  %s49, 256, %s2, [#allocation4]
    $region17: #{tpu_custom_call.1} parent=1 // pred_fallthru
      _
    // Predicated region
    $region18: #{tpu_custom_call.1} parent=1 // pred_check
      _
    $region19: #{tpu_custom_call.1} parent=1 // pred_check_branch
      %53 = sbr.rel (0) target = $region21
    $region20: #{tpu_custom_call.1} parent=1 // pred_region
      %54 = dma.done [#allocation4], 256
    $region21: #{tpu_custom_call.1} parent=1 // pred_fallthru
      _
    %55 = vsyncpa [#allocation3], 1
    %56 = vsyncpa [#allocation4], 1

</llo_original>
